<compile_context>
chip_gen: v5e
topology: v5e:2x2
jax: 0.10.0
libtpu: 0.0.40
codegen_flags: <defaults>
</compile_context>

<pallas_src>
import jax
import jax.numpy as jnp
from jax import lax
from jax.experimental import pallas as pl
from jax.experimental.pallas import tpu as pltpu


def _round_up(v, m):
    return (v + m - 1) // m * m


def _balanced_tile(n, t_max, granule):
    """Tile size that minimizes padding waste in the last (ragged) block."""
    if n <= t_max:
        return n  # single full-extent block: always a legal block shape
    t_max = max(granule, t_max // granule * granule)
    n_tiles = pl.cdiv(n, t_max)
    return min(_round_up(pl.cdiv(n, n_tiles), granule), t_max)


def _vmem_bytes(tb, tc, D, x_bufs, w_bufs, xi, wi, oi):
    return (
        x_bufs * tb * D * xi          # x tile buffers
        + w_bufs * D * tc * wi        # weight tile buffers
        + 2 * tb * tc * oi            # output tile buffers
        + tb * tc * 4                 # f32 matmul accumulator
        + tb * D * 4                  # f32 squared-x temporaries for the norm
        + (2 << 20)                   # compiler scratch headroom
    )


def _maybe_single_buffered(shape, index_map, single):
    # Single-buffer an operand whose block index is constant across the inner
    # grid axis: halves its VMEM footprint at the cost of one exposed DMA per
    # outer step (amortized over the inner trip count).
    if single:
        try:
            return pl.BlockSpec(shape, index_map, pipeline_mode=pl.Buffered(1))
        except TypeError:  # older jax without pipeline_mode kwarg
            pass
    return pl.BlockSpec(shape, index_map)


def _make_kernel(normalize: bool):
    def kernel(x_ref, w_ref, o_ref):
        # x_ref: (tb, D) native dtype, w_ref: (D, tc), o_ref: (tb, tc)
        x = x_ref[...]
        # Raw native-dtype operands into the MXU; accumulate in f32.
        acc = jnp.dot(x, w_ref[...], preferred_element_type=jnp.float32)
        if normalize:
            # Deferred L2 norm: (x @ W) * rsqrt(sum(x^2)) == (x/||x||) @ W.
            # Independent of the matmul, so the XLU reduce + EUP rsqrt overlap
            # with the MXU instead of gating it. No epsilon (torch parity):
            # all-zero rows produce inf/NaN exactly like the reference module.
            xf = x.astype(jnp.float32)
            inv = lax.rsqrt(jnp.sum(xf * xf, axis=-1, keepdims=True))
            acc = acc * inv
        o_ref[...] = acc.astype(o_ref.dtype)

    return kernel


def classification_head(x, weights, *, normalize=True, tb_max=256, tc_max=512):
    """x: [B, D], weights: [D, C] -> logits [B, C] (effective bias is zero)."""
    B, D = x.shape
    D2, C = weights.shape
    assert D == D2, "feature dims must match"

    xi = jnp.dtype(x.dtype).itemsize
    wi = jnp.dtype(weights.dtype).itemsize
    oi = xi  # output follows x.dtype (as the torch module does)

    # Per-generation VMEM budget with margin (v7x: 64 MiB, v5e/v6e: 128 MiB).
    try:
        budget = int(pltpu.get_tpu_info().vmem_capacity_bytes * 0.85)
    except Exception:  # conservative v7x-safe fallback
        budget = 48 * 1024 * 1024

    # Pick balanced tiles, decide loop order, shrink until the estimate fits.
    while True:
        tb = _balanced_tile(B, tb_max, 16)    # sublane-aligned (bf16-safe)
        tc = _balanced_tile(C, tc_max, 128)   # lane-aligned
        nb = pl.cdiv(B, tb)
        nc = pl.cdiv(C, tc)
        # Adaptive order: class-outer streams x nc times / weights once;
        # batch-outer streams weights nb times / x once. Pick the cheaper.
        class_outer = (B * D * nc * xi + D * C * wi) <= (B * D * xi + D * C * nb * wi)
        if class_outer:
            x_bufs, w_bufs = 2, (1 if nb > 1 else 2)
        else:
            x_bufs, w_bufs = (1 if nc > 1 else 2), 2
        est = _vmem_bytes(tb, tc, D, x_bufs, w_bufs, xi, wi, oi)
        if est <= budget or (tc <= 128 and tb <= 16):
            break
        if tc > 128:
            tc_max = max(128, tc // 2)
        else:
            tb_max = max(16, tb // 2)

    vmem_limit = int(min(budget, max(2 * est, 32 * 1024 * 1024)))

    if class_outer:
        grid = (nc, nb)
        x_spec = pl.BlockSpec((tb, D), lambda j, i: (i, 0))
        w_spec = _maybe_single_buffered((D, tc), lambda j, i: (0, j), w_bufs == 1)
        o_spec = pl.BlockSpec((tb, tc), lambda j, i: (i, j))
    else:
        grid = (nb, nc)
        x_spec = _maybe_single_buffered((tb, D), lambda i, j: (i, 0), x_bufs == 1)
        w_spec = pl.BlockSpec((D, tc), lambda i, j: (0, j))
        o_spec = pl.BlockSpec((tb, tc), lambda i, j: (i, j))

    cost = pl.CostEstimate(
        flops=2 * B * D * C,
        transcendentals=(B * nc) if normalize else 0,
        bytes_accessed=(
            B * D * (nc if class_outer else 1) * xi
            + D * C * (1 if class_outer else nb) * wi
            + B * C * oi
        ),
    )

    return pl.pallas_call(
        _make_kernel(normalize),
        out_shape=jax.ShapeDtypeStruct((B, C), x.dtype),
        grid_spec=pltpu.PrefetchScalarGridSpec(
            num_scalar_prefetch=0,
            grid=grid,
            in_specs=[x_spec, w_spec],
            out_specs=o_spec,
        ),
        compiler_params=pltpu.CompilerParams(
            # Outer axis "parallel": v7x megacore shards the resident operand's
            # axis so the dominant HBM stream is read once in total.
            dimension_semantics=("parallel", "arbitrary"),
            vmem_limit_bytes=vmem_limit,
        ),
        cost_estimate=cost,
    )(x, weights)


def reference(x, weights, normalize=True):
    xf = x.astype(jnp.float32)
    if normalize:
        xf = xf / jnp.linalg.norm(xf, axis=-1, keepdims=True)
    return xf @ weights.astype(jnp.float32)


if __name__ == "__main__":
    key = jax.random.PRNGKey(0)
    ks = jax.random.split(key, 8)

    # 1) f32, ragged C < 128 (full-extent single tiles), normalize on and off.
    B, D, C = 8, 64, 48
    x = jax.random.normal(ks[0], (B, D), dtype=jnp.float32)
    w = jax.random.normal(ks[1], (D, C), dtype=jnp.float32) * 0.05
    out = jax.block_until_ready(classification_head(x, w, normalize=True))
    assert out.shape == (B, C)
    assert jnp.allclose(out, reference(x, w, True), atol=1e-4, rtol=1e-4), "f32 norm"
    out_nn = jax.block_until_ready(classification_head(x, w, normalize=False))
    assert jnp.allclose(out_nn, reference(x, w, False), atol=1e-4, rtol=1e-4), "f32 no-norm"

    # 2) bf16 native-dtype MXU path, non-multiple batch.
    B2, D2, C2 = 20, 64, 128
    xb = jax.random.normal(ks[2], (B2, D2), dtype=jnp.bfloat16)
    wb = (jax.random.normal(ks[3], (D2, C2), dtype=jnp.float32) * 0.05).astype(jnp.bfloat16)
    outb = jax.block_until_ready(classification_head(xb, wb, normalize=True))
    assert outb.shape == (B2, C2)
    assert jnp.allclose(
        outb.astype(jnp.float32), reference(xb, wb, True), atol=2e-2, rtol=2e-2
    ), "bf16 norm"

    # 3) class-outer multi-tile grid, ragged B and C, single-buffered weights.
    B3, D3, C3 = 40, 64, 200
    x3 = jax.random.normal(ks[4], (B3, D3), dtype=jnp.float32)
    w3 = jax.random.normal(ks[5], (D3, C3), dtype=jnp.float32) * 0.05
    out3 = jax.block_until_ready(
        classification_head(x3, w3, normalize=True, tb_max=16, tc_max=128)
    )
    assert out3.shape == (B3, C3)
    assert jnp.allclose(out3, reference(x3, w3, True), atol=1e-4, rtol=1e-4), "ragged class-outer"

    # 4) batch-outer adaptive order (nb == 1, nc > 1), single-buffered x, ragged C.
    B4, D4, C4 = 16, 64, 300
    x4 = jax.random.normal(ks[6], (B4, D4), dtype=jnp.float32)
    w4 = jax.random.normal(ks[7], (D4, C4), dtype=jnp.float32) * 0.05
    out4 = jax.block_until_ready(
        classification_head(x4, w4, normalize=True, tc_max=128)
    )
    assert out4.shape == (B4, C4)
    assert jnp.allclose(out4, reference(x4, w4, True), atol=1e-4, rtol=1e-4), "ragged batch-outer"

    print("KERNEL_OK")
</pallas_src>

<mosaic_0001>
module attributes {stable_mosaic.version = 11 : i64} {
  func.func @kernel(%arg0: i32, %arg1: i32, %arg2: memref<8x64xf32, #tpu.memory_space<vmem>>, %arg3: memref<64x48xf32, #tpu.memory_space<vmem>>, %arg4: memref<8x48xf32, #tpu.memory_space<vmem>>) attributes {dimension_semantics = [#tpu.dimension_semantics<parallel>, #tpu.dimension_semantics<arbitrary>], iteration_bounds = array<i64: 1, 1>, scalar_prefetch = 0 : i64, scratch_operands = 0 : i64, tpu.core_type = #tpu.core_type<tc>, window_params = [{transform_indices = @transform_0, window_bounds = array<i64: 8, 64>}, {transform_indices = @transform_1, window_bounds = array<i64: 64, 48>}, {transform_indices = @transform_2, window_bounds = array<i64: 8, 48>}]} {
    %c0 = arith.constant 0 : index
    %c0_0 = arith.constant 0 : index
    %0 = vector.load %arg2[%c0, %c0_0] : memref<8x64xf32, #tpu.memory_space<vmem>>, vector<8x64xf32>
    %c0_1 = arith.constant 0 : index
    %c0_2 = arith.constant 0 : index
    %1 = vector.load %arg3[%c0_1, %c0_2] : memref<64x48xf32, #tpu.memory_space<vmem>>, vector<64x48xf32>
    %cst = arith.constant dense<0.000000e+00> : vector<8x48xf32>
    %2 = tpu.matmul %0, %1, %cst {dimension_numbers = #tpu.dot_dimension_numbers<[1], [0], [0], [1], [0, 0, 1, 1], [], []>} : vector<8x64xf32>, vector<64x48xf32>, vector<8x48xf32> -> vector<8x48xf32>
    %3 = arith.mulf %0, %0 : vector<8x64xf32>
    %cst_3 = arith.constant dense<0.000000e+00> : vector<8xf32>
    %4 = vector.multi_reduction <add>, %3, %cst_3 [1] : vector<8x64xf32> to vector<8xf32>
    %5 = vector.shape_cast %4 : vector<8xf32> to vector<8x1xf32>
    %6 = math.rsqrt %5 : vector<8x1xf32>
    %7 = vector.broadcast %6 : vector<8x1xf32> to vector<8x48xf32>
    %8 = arith.mulf %2, %7 : vector<8x48xf32>
    %c0_4 = arith.constant 0 : index
    %c0_5 = arith.constant 0 : index
    %9 = vector.load %arg4[%c0_4, %c0_5] : memref<8x48xf32, #tpu.memory_space<vmem>>, vector<8x48xf32>
    tpu.vector_store %arg4[%c0_4, %c0_5], %8 {strides = array<i32>} : memref<8x48xf32, #tpu.memory_space<vmem>>, vector<8x48xf32>,
    return
  }
  func.func @transform_0(%arg0: i32, %arg1: i32) -> (i32, i32) {
    %c0_i32 = arith.constant 0 : i32
    %c0_i32_0 = arith.constant 0 : i32
    return %arg1, %c0_i32 : i32, i32
  }
  func.func @transform_1(%arg0: i32, %arg1: i32) -> (i32, i32) {
    %c0_i32 = arith.constant 0 : i32
    %c0_i32_0 = arith.constant 0 : i32
    return %c0_i32, %arg0 : i32, i32
  }
  func.func @transform_2(%arg0: i32, %arg1: i32) -> (i32, i32) {
    %c0_i32 = arith.constant 0 : i32
    return %arg1, %arg0 : i32, i32
  }
}

</mosaic_0001>

<llo_original>
// kernel: tpu_custom_call.1
$region0: #{tpu_custom_call.1}
  #allocation0 [shape = 'u32[]', space=smem, size = 0x4, offset = 0x4, fixed_abs, tag = 'smem constant byte address 0x4 - core index']
  #allocation1 [shape = 'u32[72,128]{1,0:T(1,128)}', space=vmem, size = 0x9000, scoped, tag = 'internal scratch']
  %s0 = inlined_call_operand.vmem [shape: f32[8,64], index: 0, kind: input, shape index: {}]
  %s1 = inlined_call_operand.vmem [shape: f32[64,48], index: 1, kind: input, shape index: {}]
  %s2 = inlined_call_operand.hbm [shape: f32[8,48], index: 2, kind: output, shape index: {}]
  %s3 = sld [smem:[#allocation0]]
  $region18: #{tpu_custom_call.1} parent=0
    _
  %s5 = ssub.s32 1, %s3
  %s6 = scalar_select 0, %s5, %s3
  $region1: #{tpu_custom_call.1} parent=0
    #allocation2 [shape = 'u8[4096]{0}', space=vmem, size = 0x1000, scoped, tag = 'output window, operand 0, single buffered']
    #allocation3 [shape = 's32[1]{0}', space=sflag, size = 0x4, scoped, tag = 'scoped memory for tpu_custom_call.1']
    %7 = vsyncpa [#allocation3], 0
    // Predicated region
    $region2: #{tpu_custom_call.1} parent=1 // pred_check
      _
    $region3: #{tpu_custom_call.1} parent=1 // pred_check_branch
      %9 = sbr.rel (0) target = $region5
    $region4: #{tpu_custom_call.1} parent=1 // pred_region
      _
    $region5: #{tpu_custom_call.1} parent=1 // pred_fallthru
      _
    // Predicated region
    $region6: #{tpu_custom_call.1} parent=1 // pred_check
      _
    $region7: #{tpu_custom_call.1} parent=1 // pred_check_branch
      %11 = sbr.rel (0) target = $region9
    $region8: #{tpu_custom_call.1} parent=1 // pred_region
      _
    $region9: #{tpu_custom_call.1} parent=1 // pred_fallthru
      _
    %v12 = vld [vmem:[%s0] sm:$0xff]
    %v13 = vld [vmem:[%s1] sm:$0xff]
    %v14 = vld [vmem:[%s1 + $0x8] sm:$0xff]
    %v15 = vld [vmem:[%s1 + $0x10] sm:$0xff]
    %v16 = vld [vmem:[%s1 + $0x18] sm:$0xff]
    %v17 = vld [vmem:[%s1 + $0x20] sm:$0xff]
    %v18 = vld [vmem:[%s1 + $0x28] sm:$0xff]
    %v19 = vld [vmem:[%s1 + $0x30] sm:$0xff]
    %v20 = vld [vmem:[%s1 + $0x38] sm:$0xff]
    %vm21 = vcmask 523264
    %v23 = vsel %vm21, %v12, 0
    %25 = vmatpush.msra.mxu0 0.0
    %26 = vmatpush.msra.mxu0 0.0
    %27 = vmatpush.msra.mxu0 0.0
    %28 = vmatpush.msra.mxu0 0.0
    %29 = vmatpush.msra.mxu0 0.0
    %30 = vmatpush.msra.mxu0 0.0
    %31 = vmatpush.msra.mxu0 0.0
    %32 = vmatpush.msra.mxu0 0.0
    %33 = vmatpush.msra.mxu0 %v20
    %34 = vmatpush.msra.mxu0 %v19
    %35 = vmatpush.msra.mxu0 %v18
    %36 = vmatpush.msra.mxu0 %v17
    %37 = vmatpush.msra.mxu0 %v16
    %38 = vmatpush.msra.mxu0 %v15
    %39 = vmatpush.msra.mxu0 %v14
    %40 = vmatpush.msra.mxu0 %v13
    %41 = vmatmul.f32.gmra.mxu0 %v23
    %v42 = vpop.f32.mrf.mxu0
    %v43 = vadd.f32 0.0, %v42
    %44 = vdwg.mxu0
    %v45 = vmul.f32 %v12, %v12
    %v46 = vsel %vm21, %v45, 0.0
    %47 = vadd.xlane.f32.xlu0 %v46
    %v48 = vpop.xlane.xlu0 %47
    %v49 = vrsqrt.pop %v48
    %v50 = vmul.f32 %v49, %v48
    %v51 = vmul.f32 %v50, %v49
    %v52 = vmul.f32 0.5, %v51
    %v53 = vsub.f32 1.5, %v52
    %v54 = vmul.f32 %v49, %v53
    %vm55 = vweird.f32 %v48
    %vm56 = vweird.f32 %v49
    %vm57 = vmor %vm55, %vm56
    %v58 = vsel %vm57, %v49, %v54
    %v59 = vmul.f32 %v43, %v58
    %vm60 = vcmask 392192
    %61 = vst.msk [vmem:[#allocation2] sm:$0xff] %vm60, %v59
    // Predicated region
    $region10: #{tpu_custom_call.1} parent=1 // pred_check
      _
    $region11: #{tpu_custom_call.1} parent=1 // pred_check_branch
      %63 = sbr.rel (0) target = $region13
    $region12: #{tpu_custom_call.1} parent=1 // pred_region
      %65 = vsyncadd [#allocation3], 0
      %s67 = sshll.u32 [#allocation2], 4
      %s68 = int_to_ptr.vmem [resolvable:$true] %s67
      %s69 = sshll.u32 %s2, 4
      %s70 = int_to_ptr.hbm [resolvable:$true] %s69
      %72 = dma.vmem_to_hbm [thread:$0]  %s68, 128, %s70, [#allocation3]
    $region13: #{tpu_custom_call.1} parent=1 // pred_fallthru
      _
    // Predicated region
    $region14: #{tpu_custom_call.1} parent=1 // pred_check
      _
    $region15: #{tpu_custom_call.1} parent=1 // pred_check_branch
      %74 = sbr.rel (0) target = $region17
    $region16: #{tpu_custom_call.1} parent=1 // pred_region
      %76 = dma.done [#allocation3], 128
    $region17: #{tpu_custom_call.1} parent=1 // pred_fallthru
      _
    %77 = vsyncpa [#allocation3], 1

</llo_original>
